<compile_context>
chip_gen: v7x
topology: tpu7x:2x2x1
jax: 0.10.0
libtpu: 0.0.40
codegen_flags: <defaults>
</compile_context>

<pallas_src>
import jax
import jax.numpy as jnp
from jax.experimental import pallas as pl
from jax.experimental.pallas import tpu as pltpu


# ------------------------- helpers ------------------------------------------
def _round_up(x, m):
    return ((x + m - 1) // m) * m


def _pad_and_tiles(n):
    """Padded node count and (TM, TK) row/contraction tiles that divide it."""
    if n <= 512:
        n_pad = _round_up(n, 128)
        return n_pad, 128, n_pad          # single K tile for small graphs
    n_pad = _round_up(n, 512)
    return n_pad, 256, 512                # bf16 tiles stay well under VMEM limit


# ------------------------- Pallas kernels -----------------------------------
def _xw_kernel(x_ref, w_ref, h_ref):
    # Row-tile feature transform: (TM, Fin) @ (Fin, Fout) -> (TM, Fout)
    h_ref[...] = jnp.dot(
        x_ref[...], w_ref[...], preferred_element_type=jnp.float32
    ).astype(h_ref.dtype)


def feature_transform(x_bf16, w_bf16, tm):
    n_pad, fin_pad = x_bf16.shape
    fout_pad = w_bf16.shape[1]
    return pl.pallas_call(
        _xw_kernel,
        out_shape=jax.ShapeDtypeStruct((n_pad, fout_pad), jnp.bfloat16),
        grid=(n_pad // tm,),
        in_specs=[
            pl.BlockSpec((tm, fin_pad), lambda i: (i, 0)),
            pl.BlockSpec((fin_pad, fout_pad), lambda i: (0, 0)),
        ],
        out_specs=pl.BlockSpec((tm, fout_pad), lambda i: (i, 0)),
        compiler_params=pltpu.CompilerParams(
            dimension_semantics=("parallel",),
        ),
    )(x_bf16, w_bf16)


def _agg_kernel(a_ref, h_ref, b_ref, o_ref, acc_ref):
    k = pl.program_id(1)

    @pl.when(k == 0)
    def _():
        # Fold the bias into accumulator init (saves a full-tile VPU add).
        acc_ref[...] = jnp.broadcast_to(
            b_ref[...].astype(jnp.float32), acc_ref.shape
        )

    acc_ref[...] += jnp.dot(
        a_ref[...], h_ref[...], preferred_element_type=jnp.float32
    )

    @pl.when(k == pl.num_programs(1) - 1)
    def _():
        # Lane-dense epilogue: ReLU + single contiguous (TM, Fout_pad) store.
        o_ref[...] = jnp.maximum(acc_ref[...], 0.0).astype(o_ref.dtype)


def aggregate_relu(a_bf16, h_bf16, b_f32, tm, tk, out_dtype):
    n_pad = a_bf16.shape[0]
    fout_pad = h_bf16.shape[1]
    return pl.pallas_call(
        _agg_kernel,
        out_shape=jax.ShapeDtypeStruct((n_pad, fout_pad), out_dtype),
        grid=(n_pad // tm, n_pad // tk),
        in_specs=[
            pl.BlockSpec((tm, tk), lambda i, k: (i, k)),
            pl.BlockSpec((tk, fout_pad), lambda i, k: (k, 0)),
            pl.BlockSpec((1, fout_pad), lambda i, k: (0, 0)),
        ],
        out_specs=pl.BlockSpec((tm, fout_pad), lambda i, k: (i, 0)),
        scratch_shapes=[pltpu.VMEM((tm, fout_pad), jnp.float32)],
        compiler_params=pltpu.CompilerParams(
            dimension_semantics=("parallel", "arbitrary"),
            vmem_limit_bytes=32 * 1024 * 1024,
        ),
    )(a_bf16, h_bf16, b_f32)


# ------------------------- JAX glue -----------------------------------------
def normalized_adjacency(edge_index, num_nodes):
    """Dense D^-1/2 (A + I) D^-1/2, PyG GCNConv default (unit edge weights,
    add_remaining_self_loops semantics: existing self-loops replaced by 1)."""
    src, dst = edge_index[0], edge_index[1]
    w = (src != dst).astype(jnp.float32)       # drop explicit self-loop edges
    a = jnp.zeros((num_nodes, num_nodes), jnp.float32)
    # message flows src -> dst: row = dst (receiver), col = src (sender)
    a = a.at[dst, src].add(w)
    a = a + jnp.eye(num_nodes, dtype=jnp.float32)   # exactly-one self loop / node
    deg = jnp.sum(a, axis=1)
    d_inv_sqrt = jnp.where(deg > 0, 1.0 / jnp.sqrt(deg), 0.0)
    return d_inv_sqrt[:, None] * a * d_inv_sqrt[None, :]


class GCNBodyPallas:
    """Mirrors GCN_Body(nfeat, nhid): gc1 -> relu -> gc2 -> relu."""

    def __init__(self, nfeat, nhid, key):
        self.nfeat = nfeat
        self.nhid = nhid
        self.fin_pad = _round_up(nfeat, 128)
        self.fhid_pad = _round_up(nhid, 128)

        k1, k2, k3, k4 = jax.random.split(key, 4)
        s1 = (6.0 / (nfeat + nhid)) ** 0.5
        s2 = (6.0 / (nhid + nhid)) ** 0.5
        w1 = jax.random.uniform(k1, (nfeat, nhid), jnp.float32, -s1, s1)
        b1 = jax.random.uniform(k2, (1, nhid), jnp.float32, -0.01, 0.01)
        w2 = jax.random.uniform(k3, (nhid, nhid), jnp.float32, -s2, s2)
        b2 = jax.random.uniform(k4, (1, nhid), jnp.float32, -0.01, 0.01)

        # Zero-pad params to lane-dense (multiple-of-128) feature dims.
        self.w1 = jnp.zeros((self.fin_pad, self.fhid_pad), jnp.bfloat16).at[
            :nfeat, :nhid].set(w1.astype(jnp.bfloat16))
        self.b1 = jnp.zeros((1, self.fhid_pad), jnp.float32).at[:, :nhid].set(b1)
        self.w2 = jnp.zeros((self.fhid_pad, self.fhid_pad), jnp.bfloat16).at[
            :nhid, :nhid].set(w2.astype(jnp.bfloat16))
        self.b2 = jnp.zeros((1, self.fhid_pad), jnp.float32).at[:, :nhid].set(b2)

        self._forward_jit = jax.jit(self._forward)

    def _forward(self, x, edge_index):
        n = x.shape[0]
        n_pad, tm, tk = _pad_and_tiles(n)

        # Dense normalized adjacency, padded and cast to bf16 once.
        a_hat = normalized_adjacency(edge_index, n)
        a_pad = jnp.zeros((n_pad, n_pad), jnp.bfloat16).at[:n, :n].set(
            a_hat.astype(jnp.bfloat16))

        x_pad = jnp.zeros((n_pad, self.fin_pad), jnp.bfloat16).at[
            :n, :self.nfeat].set(x.astype(jnp.bfloat16))

        # gc1 + relu  (bf16 output feeds layer 2 directly, no extra cast pass)
        h = feature_transform(x_pad, self.w1, tm)                      # X @ W1
        h1 = aggregate_relu(a_pad, h, self.b1, tm, tk, jnp.bfloat16)   # relu(A H + b1)

        # gc2 + relu  (final layer stored in f32)
        h = feature_transform(h1, self.w2, tm)                         # H1 @ W2
        h2 = aggregate_relu(a_pad, h, self.b2, tm, tk, jnp.float32)    # relu(A H + b2)

        return h2[:n, :self.nhid]

    def __call__(self, x, edge_index):
        return self._forward_jit(x, edge_index)


# ------------------------- demo ---------------------------------------------
if __name__ == "__main__":
    key = jax.random.PRNGKey(0)
    k_x, k_e, k_p = jax.random.split(key, 3)

    num_nodes, nfeat, nhid, num_edges = 64, 16, 32, 128

    x = jax.random.normal(k_x, (num_nodes, nfeat), jnp.float32)
    edge_index = jax.random.randint(
        k_e, (2, num_edges), 0, num_nodes, dtype=jnp.int32
    )

    model = GCNBodyPallas(nfeat, nhid, k_p)
    out = model(x, edge_index)
    out = jax.block_until_ready(out)

    assert out.shape == (num_nodes, nhid)
    assert bool(jnp.all(out >= 0.0))  # ReLU output
    assert bool(jnp.all(jnp.isfinite(out)))
    print("KERNEL_OK")
</pallas_src>

<mosaic_0001>
module attributes {stable_mosaic.version = 11 : i64} {
  func.func private @main(%arg0: i32) attributes {dimension_semantics = [#tpu.dimension_semantics<core_parallel>], iteration_bounds = array<i64: 2>, tpu.core_type = #tpu.core_type<sc_scalar_subcore>, window_params = []} {
    return
  }
}

module attributes {stable_mosaic.version = 11 : i64} {
  func.func private @main(%arg0: i32) attributes {dimension_semantics = [#tpu.dimension_semantics<core_parallel>], iteration_bounds = array<i64: 2>, tpu.core_type = #tpu.core_type<sc_scalar_subcore>, window_params = []} {
    return
  }
}

module attributes {stable_mosaic.version = 11 : i64} {
  func.func @_agg_kernel(%arg0: i32, %arg1: i32, %arg2: memref<128x128xbf16, #tpu.memory_space<vmem>>, %arg3: memref<128x128xbf16, #tpu.memory_space<vmem>>, %arg4: memref<1x128xf32, #tpu.memory_space<vmem>>, %arg5: memref<128x128xf32, #tpu.memory_space<vmem>>, %arg6: memref<128x128xf32, #tpu.memory_space<vmem>>) attributes {dimension_semantics = [#tpu.dimension_semantics<parallel>, #tpu.dimension_semantics<arbitrary>], iteration_bounds = array<i64: 1, 1>, scalar_prefetch = 0 : i64, scratch_operands = 1 : i64, tpu.core_type = #tpu.core_type<tc>, window_params = [{transform_indices = @transform_0, window_bounds = array<i64: 128, 128>}, {transform_indices = @transform_1, window_bounds = array<i64: 128, 128>}, {pipeline_mode = #tpu.pipeline_mode<synchronous>, transform_indices = @transform_2, window_bounds = array<i64: 1, 128>}, {transform_indices = @transform_3, window_bounds = array<i64: 128, 128>}]} {
    %c0_i32 = arith.constant 0 : i32
    %0 = arith.cmpi eq, %arg1, %c0_i32 : i32
    %1 = arith.extui %0 : i1 to i32
    %c0_i32_0 = arith.constant 0 : i32
    %2 = arith.cmpi ne, %1, %c0_i32_0 : i32
    scf.if %2 {
      %c0_10 = arith.constant 0 : index
      %c0_11 = arith.constant 0 : index
      %12 = vector.load %arg4[%c0_10, %c0_11] : memref<1x128xf32, #tpu.memory_space<vmem>>, vector<1x128xf32>
      %13 = vector.shape_cast %12 : vector<1x128xf32> to vector<1x128xf32>
      %14 = vector.broadcast %13 : vector<1x128xf32> to vector<128x128xf32>
      %c0_12 = arith.constant 0 : index
      %c0_13 = arith.constant 0 : index
      %15 = vector.load %arg6[%c0_12, %c0_13] : memref<128x128xf32, #tpu.memory_space<vmem>>, vector<128x128xf32>
      tpu.vector_store %arg6[%c0_12, %c0_13], %14 {strides = array<i32>} : memref<128x128xf32, #tpu.memory_space<vmem>>, vector<128x128xf32>,
    } else {
    }
    %c0 = arith.constant 0 : index
    %c0_1 = arith.constant 0 : index
    %3 = vector.load %arg6[%c0, %c0_1] : memref<128x128xf32, #tpu.memory_space<vmem>>, vector<128x128xf32>
    %c0_2 = arith.constant 0 : index
    %c0_3 = arith.constant 0 : index
    %4 = vector.load %arg2[%c0_2, %c0_3] : memref<128x128xbf16, #tpu.memory_space<vmem>>, vector<128x128xbf16>
    %c0_4 = arith.constant 0 : index
    %c0_5 = arith.constant 0 : index
    %5 = vector.load %arg3[%c0_4, %c0_5] : memref<128x128xbf16, #tpu.memory_space<vmem>>, vector<128x128xbf16>
    %cst = arith.constant dense<0.000000e+00> : vector<128x128xf32>
    %6 = tpu.matmul %4, %5, %cst {dimension_numbers = #tpu.dot_dimension_numbers<[1], [0], [0], [1], [0, 0, 1, 1], [], []>} : vector<128x128xbf16>, vector<128x128xbf16>, vector<128x128xf32> -> vector<128x128xf32>
    %7 = arith.addf %3, %6 : vector<128x128xf32>
    %c0_6 = arith.constant 0 : index
    %c0_7 = arith.constant 0 : index
    %8 = vector.load %arg6[%c0_6, %c0_7] : memref<128x128xf32, #tpu.memory_space<vmem>>, vector<128x128xf32>
    tpu.vector_store %arg6[%c0_6, %c0_7], %7 {strides = array<i32>} : memref<128x128xf32, #tpu.memory_space<vmem>>, vector<128x128xf32>,
    %c0_i32_8 = arith.constant 0 : i32
    %9 = arith.cmpi eq, %arg1, %c0_i32_8 : i32
    %10 = arith.extui %9 : i1 to i32
    %c0_i32_9 = arith.constant 0 : i32
    %11 = arith.cmpi ne, %10, %c0_i32_9 : i32
    scf.if %11 {
      %c0_10 = arith.constant 0 : index
      %c0_11 = arith.constant 0 : index
      %12 = vector.load %arg6[%c0_10, %c0_11] : memref<128x128xf32, #tpu.memory_space<vmem>>, vector<128x128xf32>
      %cst_12 = arith.constant 0.000000e+00 : f32
      %13 = vector.broadcast %cst_12 : f32 to vector<128x128xf32>
      %14 = arith.maximumf %12, %13 : vector<128x128xf32>
      %c0_13 = arith.constant 0 : index
      %c0_14 = arith.constant 0 : index
      %15 = vector.load %arg5[%c0_13, %c0_14] : memref<128x128xf32, #tpu.memory_space<vmem>>, vector<128x128xf32>
      tpu.vector_store %arg5[%c0_13, %c0_14], %14 {strides = array<i32>} : memref<128x128xf32, #tpu.memory_space<vmem>>, vector<128x128xf32>,
    } else {
    }
    return
  }
  func.func @transform_0(%arg0: i32, %arg1: i32) -> (i32, i32) {
    %c0_i32 = arith.constant 0 : i32
    return %arg0, %arg1 : i32, i32
  }
  func.func @transform_1(%arg0: i32, %arg1: i32) -> (i32, i32) {
    %c0_i32 = arith.constant 0 : i32
    %c0_i32_0 = arith.constant 0 : i32
    return %arg1, %c0_i32 : i32, i32
  }
  func.func @transform_2(%arg0: i32, %arg1: i32) -> (i32, i32) {
    %c0_i32 = arith.constant 0 : i32
    %c0_i32_0 = arith.constant 0 : i32
    %c0_i32_1 = arith.constant 0 : i32
    return %c0_i32, %c0_i32_0 : i32, i32
  }
  func.func @transform_3(%arg0: i32, %arg1: i32) -> (i32, i32) {
    %c0_i32 = arith.constant 0 : i32
    %c0_i32_0 = arith.constant 0 : i32
    return %arg0, %c0_i32 : i32, i32
  }
}

module attributes {stable_mosaic.version = 11 : i64} {
  func.func @_xw_kernel(%arg0: i32, %arg1: memref<128x128xbf16, #tpu.memory_space<vmem>>, %arg2: memref<128x128xbf16, #tpu.memory_space<vmem>>, %arg3: memref<128x128xbf16, #tpu.memory_space<vmem>>) attributes {dimension_semantics = [#tpu.dimension_semantics<parallel>], iteration_bounds = array<i64: 1>, scalar_prefetch = 0 : i64, scratch_operands = 0 : i64, tpu.core_type = #tpu.core_type<tc>, window_params = [{transform_indices = @transform_0, window_bounds = array<i64: 128, 128>}, {pipeline_mode = #tpu.pipeline_mode<synchronous>, transform_indices = @transform_1, window_bounds = array<i64: 128, 128>}, {transform_indices = @transform_2, window_bounds = array<i64: 128, 128>}]} {
    %c0 = arith.constant 0 : index
    %c0_0 = arith.constant 0 : index
    %0 = vector.load %arg1[%c0, %c0_0] : memref<128x128xbf16, #tpu.memory_space<vmem>>, vector<128x128xbf16>
    %c0_1 = arith.constant 0 : index
    %c0_2 = arith.constant 0 : index
    %1 = vector.load %arg2[%c0_1, %c0_2] : memref<128x128xbf16, #tpu.memory_space<vmem>>, vector<128x128xbf16>
    %cst = arith.constant dense<0.000000e+00> : vector<128x128xf32>
    %2 = tpu.matmul %0, %1, %cst {dimension_numbers = #tpu.dot_dimension_numbers<[1], [0], [0], [1], [0, 0, 1, 1], [], []>} : vector<128x128xbf16>, vector<128x128xbf16>, vector<128x128xf32> -> vector<128x128xf32>
    %3 = arith.truncf %2 : vector<128x128xf32> to vector<128x128xbf16>
    %c0_3 = arith.constant 0 : index
    %c0_4 = arith.constant 0 : index
    %4 = vector.load %arg3[%c0_3, %c0_4] : memref<128x128xbf16, #tpu.memory_space<vmem>>, vector<128x128xbf16>
    tpu.vector_store %arg3[%c0_3, %c0_4], %3 {strides = array<i32>} : memref<128x128xbf16, #tpu.memory_space<vmem>>, vector<128x128xbf16>,
    return
  }
  func.func @transform_0(%arg0: i32) -> (i32, i32) {
    %c0_i32 = arith.constant 0 : i32
    %c0_i32_0 = arith.constant 0 : i32
    return %arg0, %c0_i32 : i32, i32
  }
  func.func @transform_1(%arg0: i32) -> (i32, i32) {
    %c0_i32 = arith.constant 0 : i32
    %c0_i32_0 = arith.constant 0 : i32
    %c0_i32_1 = arith.constant 0 : i32
    return %c0_i32, %c0_i32_0 : i32, i32
  }
  func.func @transform_2(%arg0: i32) -> (i32, i32) {
    %c0_i32 = arith.constant 0 : i32
    %c0_i32_0 = arith.constant 0 : i32
    return %arg0, %c0_i32 : i32, i32
  }
}

module attributes {stable_mosaic.version = 11 : i64} {
  func.func @_agg_kernel(%arg0: i32, %arg1: i32, %arg2: memref<128x128xbf16, #tpu.memory_space<vmem>>, %arg3: memref<128x128xbf16, #tpu.memory_space<vmem>>, %arg4: memref<1x128xf32, #tpu.memory_space<vmem>>, %arg5: memref<128x128xbf16, #tpu.memory_space<vmem>>, %arg6: memref<128x128xf32, #tpu.memory_space<vmem>>) attributes {dimension_semantics = [#tpu.dimension_semantics<parallel>, #tpu.dimension_semantics<arbitrary>], iteration_bounds = array<i64: 1, 1>, scalar_prefetch = 0 : i64, scratch_operands = 1 : i64, tpu.core_type = #tpu.core_type<tc>, window_params = [{transform_indices = @transform_0, window_bounds = array<i64: 128, 128>}, {transform_indices = @transform_1, window_bounds = array<i64: 128, 128>}, {pipeline_mode = #tpu.pipeline_mode<synchronous>, transform_indices = @transform_2, window_bounds = array<i64: 1, 128>}, {transform_indices = @transform_3, window_bounds = array<i64: 128, 128>}]} {
    %c0_i32 = arith.constant 0 : i32
    %0 = arith.cmpi eq, %arg1, %c0_i32 : i32
    %1 = arith.extui %0 : i1 to i32
    %c0_i32_0 = arith.constant 0 : i32
    %2 = arith.cmpi ne, %1, %c0_i32_0 : i32
    scf.if %2 {
      %c0_10 = arith.constant 0 : index
      %c0_11 = arith.constant 0 : index
      %12 = vector.load %arg4[%c0_10, %c0_11] : memref<1x128xf32, #tpu.memory_space<vmem>>, vector<1x128xf32>
      %13 = vector.shape_cast %12 : vector<1x128xf32> to vector<1x128xf32>
      %14 = vector.broadcast %13 : vector<1x128xf32> to vector<128x128xf32>
      %c0_12 = arith.constant 0 : index
      %c0_13 = arith.constant 0 : index
      %15 = vector.load %arg6[%c0_12, %c0_13] : memref<128x128xf32, #tpu.memory_space<vmem>>, vector<128x128xf32>
      tpu.vector_store %arg6[%c0_12, %c0_13], %14 {strides = array<i32>} : memref<128x128xf32, #tpu.memory_space<vmem>>, vector<128x128xf32>,
    } else {
    }
    %c0 = arith.constant 0 : index
    %c0_1 = arith.constant 0 : index
    %3 = vector.load %arg6[%c0, %c0_1] : memref<128x128xf32, #tpu.memory_space<vmem>>, vector<128x128xf32>
    %c0_2 = arith.constant 0 : index
    %c0_3 = arith.constant 0 : index
    %4 = vector.load %arg2[%c0_2, %c0_3] : memref<128x128xbf16, #tpu.memory_space<vmem>>, vector<128x128xbf16>
    %c0_4 = arith.constant 0 : index
    %c0_5 = arith.constant 0 : index
    %5 = vector.load %arg3[%c0_4, %c0_5] : memref<128x128xbf16, #tpu.memory_space<vmem>>, vector<128x128xbf16>
    %cst = arith.constant dense<0.000000e+00> : vector<128x128xf32>
    %6 = tpu.matmul %4, %5, %cst {dimension_numbers = #tpu.dot_dimension_numbers<[1], [0], [0], [1], [0, 0, 1, 1], [], []>} : vector<128x128xbf16>, vector<128x128xbf16>, vector<128x128xf32> -> vector<128x128xf32>
    %7 = arith.addf %3, %6 : vector<128x128xf32>
    %c0_6 = arith.constant 0 : index
    %c0_7 = arith.constant 0 : index
    %8 = vector.load %arg6[%c0_6, %c0_7] : memref<128x128xf32, #tpu.memory_space<vmem>>, vector<128x128xf32>
    tpu.vector_store %arg6[%c0_6, %c0_7], %7 {strides = array<i32>} : memref<128x128xf32, #tpu.memory_space<vmem>>, vector<128x128xf32>,
    %c0_i32_8 = arith.constant 0 : i32
    %9 = arith.cmpi eq, %arg1, %c0_i32_8 : i32
    %10 = arith.extui %9 : i1 to i32
    %c0_i32_9 = arith.constant 0 : i32
    %11 = arith.cmpi ne, %10, %c0_i32_9 : i32
    scf.if %11 {
      %c0_10 = arith.constant 0 : index
      %c0_11 = arith.constant 0 : index
      %12 = vector.load %arg6[%c0_10, %c0_11] : memref<128x128xf32, #tpu.memory_space<vmem>>, vector<128x128xf32>
      %cst_12 = arith.constant 0.000000e+00 : f32
      %13 = vector.broadcast %cst_12 : f32 to vector<128x128xf32>
      %14 = arith.maximumf %12, %13 : vector<128x128xf32>
      %15 = arith.truncf %14 : vector<128x128xf32> to vector<128x128xbf16>
      %c0_13 = arith.constant 0 : index
      %c0_14 = arith.constant 0 : index
      %16 = vector.load %arg5[%c0_13, %c0_14] : memref<128x128xbf16, #tpu.memory_space<vmem>>, vector<128x128xbf16>
      tpu.vector_store %arg5[%c0_13, %c0_14], %15 {strides = array<i32>} : memref<128x128xbf16, #tpu.memory_space<vmem>>, vector<128x128xbf16>,
    } else {
    }
    return
  }
  func.func @transform_0(%arg0: i32, %arg1: i32) -> (i32, i32) {
    %c0_i32 = arith.constant 0 : i32
    return %arg0, %arg1 : i32, i32
  }
  func.func @transform_1(%arg0: i32, %arg1: i32) -> (i32, i32) {
    %c0_i32 = arith.constant 0 : i32
    %c0_i32_0 = arith.constant 0 : i32
    return %arg1, %c0_i32 : i32, i32
  }
  func.func @transform_2(%arg0: i32, %arg1: i32) -> (i32, i32) {
    %c0_i32 = arith.constant 0 : i32
    %c0_i32_0 = arith.constant 0 : i32
    %c0_i32_1 = arith.constant 0 : i32
    return %c0_i32, %c0_i32_0 : i32, i32
  }
  func.func @transform_3(%arg0: i32, %arg1: i32) -> (i32, i32) {
    %c0_i32 = arith.constant 0 : i32
    %c0_i32_0 = arith.constant 0 : i32
    return %arg0, %c0_i32 : i32, i32
  }
}

</mosaic_0001>

<llo_original>
// kernel: _forward.7
$region0: #{_forward.7}
  #allocation0 [shape = 'u32[]', space=smem, size = 0x4, offset = 0x4, fixed_abs, tag = 'smem constant byte address 0x4 - core index']
  #allocation1 [shape = 'u32[144,128]{1,0:T(1,128)}', space=vmem, size = 0x12000, scoped, tag = 'internal scratch']
  #allocation2 [shape = 'f32[128,128]{1,0:T(8,128)}', space=vmem, size = 0x10000, scoped, tag = 'scratch operand']
  %s0 = inlined_call_operand.vmem [shape: bf16[128,128], index: 0, kind: input, shape index: {}]
  %s1 = inlined_call_operand.vmem [shape: bf16[128,128], index: 1, kind: input, shape index: {}]
  %s2 = inlined_call_operand.vmem [shape: f32[1,128], index: 2, kind: input, shape index: {}]
  %s3 = inlined_call_operand.vmem [shape: f32[128,128], index: 3, kind: output, shape index: {}]
  %s4 = sld [smem:[#allocation0]]
  $region30: #{_forward.7} parent=0
    _
  %s6 = ssub.s32 1, %s4
  %s7 = scalar_select 0, %s6, %s4
  // Predicated region
  $region2: #{_forward.7} parent=0 // pred_check
    _
  $region3: #{_forward.7} parent=0 // pred_check_branch
    %9 = sbr.rel (0) target = $region5
  $region4: #{_forward.7} parent=0 // pred_region
    _
  $region5: #{_forward.7} parent=0 // pred_fallthru
    _
  // Predicated region
  $region6: #{_forward.7} parent=0 // pred_check
    _
  $region7: #{_forward.7} parent=0 // pred_check_branch
    %11 = sbr.rel (0) target = $region9
  $region8: #{_forward.7} parent=0 // pred_region
    _
  $region9: #{_forward.7} parent=0 // pred_fallthru
    _
  // Predicated region
  $region10: #{_forward.7} parent=0 // pred_check
    _
  $region11: #{_forward.7} parent=0 // pred_check_branch
    %13 = sbr.rel (0) target = $region13
  $region12: #{_forward.7} parent=0 // pred_region
    _
  $region13: #{_forward.7} parent=0 // pred_fallthru
    _
  %p15 = scmp.eq.s32.totalorder 0, 0
  // Predicated region
  $region14: #{_forward.7} parent=0 // pred_check
    %p16 = pneg %p15
  $region15: #{_forward.7} parent=0 // pred_check_branch
    %18 = sbr.rel (%p16) target = $region17
  $region16: #{_forward.7} parent=0 // pred_region
    %v19 = vld [vmem:[%s2] sm:$0x1]
    %v21 = vlaneseq
    %v22 = vshrl.u32 %v21, 7
    %v23 = vsub.s32 0, %v22
    %v24 = vrot.slane %v19, %v23
    %26 = vst [vmem:[#allocation2] sm:$0xff] %v24
    %27 = vst [vmem:[#allocation2 + $0x8] sm:$0xff] %v24
    %28 = vst [vmem:[#allocation2 + $0x10] sm:$0xff] %v24
    %29 = vst [vmem:[#allocation2 + $0x18] sm:$0xff] %v24
    %30 = vst [vmem:[#allocation2 + $0x20] sm:$0xff] %v24
    %31 = vst [vmem:[#allocation2 + $0x28] sm:$0xff] %v24
    %32 = vst [vmem:[#allocation2 + $0x30] sm:$0xff] %v24
    %33 = vst [vmem:[#allocation2 + $0x38] sm:$0xff] %v24
    %34 = vst [vmem:[#allocation2 + $0x40] sm:$0xff] %v24
    %35 = vst [vmem:[#allocation2 + $0x48] sm:$0xff] %v24
    %36 = vst [vmem:[#allocation2 + $0x50] sm:$0xff] %v24
    %37 = vst [vmem:[#allocation2 + $0x58] sm:$0xff] %v24
    %38 = vst [vmem:[#allocation2 + $0x60] sm:$0xff] %v24
    %39 = vst [vmem:[#allocation2 + $0x68] sm:$0xff] %v24
    %40 = vst [vmem:[#allocation2 + $0x70] sm:$0xff] %v24
    %41 = vst [vmem:[#allocation2 + $0x78] sm:$0xff] %v24
  $region17: #{_forward.7} parent=0 // pred_fallthru
    _
  %v42 = vld [vmem:[#allocation2] sm:$0xff]
  %v43 = vld [vmem:[#allocation2 + $0x8] sm:$0xff]
  %v44 = vld [vmem:[#allocation2 + $0x10] sm:$0xff]
  %v45 = vld [vmem:[#allocation2 + $0x18] sm:$0xff]
  %v46 = vld [vmem:[#allocation2 + $0x20] sm:$0xff]
  %v47 = vld [vmem:[#allocation2 + $0x28] sm:$0xff]
  %v48 = vld [vmem:[#allocation2 + $0x30] sm:$0xff]
  %v49 = vld [vmem:[#allocation2 + $0x38] sm:$0xff]
  %v50 = vld [vmem:[#allocation2 + $0x40] sm:$0xff]
  %v51 = vld [vmem:[#allocation2 + $0x48] sm:$0xff]
  %v52 = vld [vmem:[#allocation2 + $0x50] sm:$0xff]
  %v53 = vld [vmem:[#allocation2 + $0x58] sm:$0xff]
  %v54 = vld [vmem:[#allocation2 + $0x60] sm:$0xff]
  %v55 = vld [vmem:[#allocation2 + $0x68] sm:$0xff]
  %v56 = vld [vmem:[#allocation2 + $0x70] sm:$0xff]
  %v57 = vld [vmem:[#allocation2 + $0x78] sm:$0xff]
  %v58 = vld [vmem:[%s0] sm:$0xf]
  %v59 = vld [vmem:[%s0 + $0x4] sm:$0xf]
  %v60 = vld [vmem:[%s0 + $0x8] sm:$0xf]
  %v61 = vld [vmem:[%s0 + $0xc] sm:$0xf]
  %v62 = vld [vmem:[%s0 + $0x10] sm:$0xf]
  %v63 = vld [vmem:[%s0 + $0x14] sm:$0xf]
  %v64 = vld [vmem:[%s0 + $0x18] sm:$0xf]
  %v65 = vld [vmem:[%s0 + $0x1c] sm:$0xf]
  %v66 = vld [vmem:[%s0 + $0x20] sm:$0xf]
  %v67 = vld [vmem:[%s0 + $0x24] sm:$0xf]
  %v68 = vld [vmem:[%s0 + $0x28] sm:$0xf]
  %v69 = vld [vmem:[%s0 + $0x2c] sm:$0xf]
  %v70 = vld [vmem:[%s0 + $0x30] sm:$0xf]
  %v71 = vld [vmem:[%s0 + $0x34] sm:$0xf]
  %v72 = vld [vmem:[%s0 + $0x38] sm:$0xf]
  %v73 = vld [vmem:[%s0 + $0x3c] sm:$0xf]
  %v74 = vld [vmem:[%s1] sm:$0xf]
  %v75 = vld [vmem:[%s1 + $0x4] sm:$0xf]
  %v76 = vld [vmem:[%s1 + $0x8] sm:$0xf]
  %v77 = vld [vmem:[%s1 + $0xc] sm:$0xf]
  %v78 = vld [vmem:[%s1 + $0x10] sm:$0xf]
  %v79 = vld [vmem:[%s1 + $0x14] sm:$0xf]
  %v80 = vld [vmem:[%s1 + $0x18] sm:$0xf]
  %v81 = vld [vmem:[%s1 + $0x1c] sm:$0xf]
  %v82 = vld [vmem:[%s1 + $0x20] sm:$0xf]
  %v83 = vld [vmem:[%s1 + $0x24] sm:$0xf]
  %v84 = vld [vmem:[%s1 + $0x28] sm:$0xf]
  %v85 = vld [vmem:[%s1 + $0x2c] sm:$0xf]
  %v86 = vld [vmem:[%s1 + $0x30] sm:$0xf]
  %v87 = vld [vmem:[%s1 + $0x34] sm:$0xf]
  %v88 = vld [vmem:[%s1 + $0x38] sm:$0xf]
  %v89 = vld [vmem:[%s1 + $0x3c] sm:$0xf]
  %v106 = vunpack.c.l.b16 %v58
  %v107 = vunpack.c.l.b16 %v59
  %v108 = vunpack.c.l.b16 %v60
  %v109 = vunpack.c.l.b16 %v61
  %v110 = vunpack.c.l.b16 %v62
  %v111 = vunpack.c.l.b16 %v63
  %v112 = vunpack.c.l.b16 %v64
  %v113 = vunpack.c.l.b16 %v65
  %v114 = vunpack.c.l.b16 %v66
  %v115 = vunpack.c.l.b16 %v67
  %v116 = vunpack.c.l.b16 %v68
  %v117 = vunpack.c.l.b16 %v69
  %v118 = vunpack.c.l.b16 %v70
  %v119 = vunpack.c.l.b16 %v71
  %v120 = vunpack.c.l.b16 %v72
  %v121 = vunpack.c.l.b16 %v73
  %v122 = vpack.c.b16 %v107, %v106
  %v123 = vpack.c.b16 %v109, %v108
  %v124 = vpack.c.b16 %v111, %v110
  %v125 = vpack.c.b16 %v113, %v112
  %v126 = vpack.c.b16 %v115, %v114
  %v127 = vpack.c.b16 %v117, %v116
  %v128 = vpack.c.b16 %v119, %v118
  %v129 = vpack.c.b16 %v121, %v120
  %v154 = vunpack.c.l.b16 %v74
  %v155 = vunpack.c.l.b16 %v75
  %v156 = vunpack.c.l.b16 %v76
  %v157 = vunpack.c.l.b16 %v77
  %v158 = vunpack.c.l.b16 %v78
  %v159 = vunpack.c.l.b16 %v79
  %v160 = vunpack.c.l.b16 %v80
  %v161 = vunpack.c.l.b16 %v81
  %v162 = vunpack.c.l.b16 %v82
  %v163 = vunpack.c.l.b16 %v83
  %v164 = vunpack.c.l.b16 %v84
  %v165 = vunpack.c.l.b16 %v85
  %v166 = vunpack.c.l.b16 %v86
  %v167 = vunpack.c.l.b16 %v87
  %v168 = vunpack.c.l.b16 %v88
  %v169 = vunpack.c.l.b16 %v89
  %v170 = vpack.c.b16 %v155, %v154
  %v171 = vpack.c.b16 %v157, %v156
  %v172 = vpack.c.b16 %v159, %v158
  %v173 = vpack.c.b16 %v161, %v160
  %v174 = vpack.c.b16 %v163, %v162
  %v175 = vpack.c.b16 %v165, %v164
  %v176 = vpack.c.b16 %v167, %v166
  %v177 = vpack.c.b16 %v169, %v168
  %186 = vmatprep.subr.bf16.mxu0 0
  %187 = vmatpush1.bf16.msra.mxu0 %v170
  %188 = vmatprep.subr.bf16.mxu0 0
  %189 = vmatpush1.bf16.msra.mxu0 %v171
  %190 = vmatprep.subr.bf16.mxu0 0
  %191 = vmatpush1.bf16.msra.mxu0 %v172
  %192 = vmatprep.subr.bf16.mxu0 0
  %193 = vmatpush1.bf16.msra.mxu0 %v173
  %194 = vmatprep.subr.bf16.mxu0 0
  %195 = vmatpush1.bf16.msra.mxu0 %v174
  %196 = vmatprep.subr.bf16.mxu0 0
  %197 = vmatpush1.bf16.msra.mxu0 %v175
  %198 = vmatprep.subr.bf16.mxu0 0
  %199 = vmatpush1.bf16.msra.mxu0 %v176
  %200 = vmatprep.subr.bf16.mxu0 0
  %201 = vmatpush1.bf16.msra.mxu0 %v177
  %202 = vmatprep.subr.bf16.mxu0 0
  %203 = vmatpush1.bf16.msra.mxu0 0
  %204 = vmatprep.subr.bf16.mxu0 0
  %205 = vmatpush1.bf16.msra.mxu0 0
  %206 = vmatprep.subr.bf16.mxu0 0
  %207 = vmatpush1.bf16.msra.mxu0 0
  %208 = vmatprep.subr.bf16.mxu0 0
  %209 = vmatpush1.bf16.msra.mxu0 0
  %210 = vmatprep.subr.bf16.mxu0 0
  %211 = vmatpush1.bf16.msra.mxu0 0
  %212 = vmatprep.subr.bf16.mxu0 0
  %213 = vmatpush1.bf16.msra.mxu0 0
  %214 = vmatprep.subr.bf16.mxu0 0
  %215 = vmatpush1.bf16.msra.mxu0 0
  %216 = vmatprep.subr.bf16.mxu0 0
  %217 = vmatpush1.bf16.msra.mxu0 0
  %218 = vmatprep.mubr.bf16.mxu0 0
  %219 = vmatmul.mubr.bf16.gmra.mrb[0].mxu0 %v122
  %v220 = vpop.f32.mrb[0].mxu0
  %v221 = vadd.f32 0.0, %v220
  %v222 = vpop.f32.mrb[0].mxu0
  %v223 = vpop.f32.mrb[0].mxu0
  %v224 = vadd.f32 0.0, %v223
  %v225 = vpop.f32.mrb[0].mxu0
  %226 = vmatprep.mubr.bf16.mxu0 0
  %227 = vmatmul.mubr.bf16.gmra.mrb[0].mxu0 %v123
  %v228 = vpop.f32.mrb[0].mxu0
  %v229 = vadd.f32 0.0, %v228
  %v230 = vpop.f32.mrb[0].mxu0
  %v231 = vpop.f32.mrb[0].mxu0
  %v232 = vadd.f32 0.0, %v231
  %v233 = vpop.f32.mrb[0].mxu0
  %234 = vmatprep.mubr.bf16.mxu0 0
  %235 = vmatmul.mubr.bf16.gmra.mrb[0].mxu0 %v124
  %v236 = vpop.f32.mrb[0].mxu0
  %v237 = vadd.f32 0.0, %v236
  %v238 = vpop.f32.mrb[0].mxu0
  %v239 = vpop.f32.mrb[0].mxu0
  %v240 = vadd.f32 0.0, %v239
  %v241 = vpop.f32.mrb[0].mxu0
  %242 = vmatprep.mubr.bf16.mxu0 0
  %243 = vmatmul.mubr.bf16.gmra.mrb[0].mxu0 %v125
  %v244 = vpop.f32.mrb[0].mxu0
  %v245 = vadd.f32 0.0, %v244
  %v246 = vpop.f32.mrb[0].mxu0
  %v247 = vpop.f32.mrb[0].mxu0
  %v248 = vadd.f32 0.0, %v247
  %v249 = vpop.f32.mrb[0].mxu0
  %250 = vmatprep.mubr.bf16.mxu0 0
  %251 = vmatmul.mubr.bf16.gmra.mrb[0].mxu0 %v126
  %v252 = vpop.f32.mrb[0].mxu0
  %v253 = vadd.f32 0.0, %v252
  %v254 = vpop.f32.mrb[0].mxu0
  %v255 = vpop.f32.mrb[0].mxu0
  %v256 = vadd.f32 0.0, %v255
  %v257 = vpop.f32.mrb[0].mxu0
  %258 = vmatprep.mubr.bf16.mxu0 0
  %259 = vmatmul.mubr.bf16.gmra.mrb[0].mxu0 %v127
  %v260 = vpop.f32.mrb[0].mxu0
  %v261 = vadd.f32 0.0, %v260
  %v262 = vpop.f32.mrb[0].mxu0
  %v263 = vpop.f32.mrb[0].mxu0
  %v264 = vadd.f32 0.0, %v263
  %v265 = vpop.f32.mrb[0].mxu0
  %266 = vmatprep.mubr.bf16.mxu0 0
  %267 = vmatmul.mubr.bf16.gmra.mrb[0].mxu0 %v128
  %v268 = vpop.f32.mrb[0].mxu0
  %v269 = vadd.f32 0.0, %v268
  %v270 = vpop.f32.mrb[0].mxu0
  %v271 = vpop.f32.mrb[0].mxu0
  %v272 = vadd.f32 0.0, %v271
  %v273 = vpop.f32.mrb[0].mxu0
  %274 = vmatprep.mubr.bf16.mxu0 0
  %275 = vmatmul.mubr.bf16.gmra.mrb[0].mxu0 %v129
  %v276 = vpop.f32.mrb[0].mxu0
  %v277 = vadd.f32 0.0, %v276
  %v278 = vpop.f32.mrb[0].mxu0
  %v279 = vpop.f32.mrb[0].mxu0
  %v280 = vadd.f32 0.0, %v279
  %v281 = vpop.f32.mrb[0].mxu0
  %282 = vdwg.mxu0
  %v283 = vadd.f32 %v42, %v221
  %v284 = vadd.f32 %v43, %v224
  %v285 = vadd.f32 %v44, %v229
  %v286 = vadd.f32 %v45, %v232
  %v287 = vadd.f32 %v46, %v237
  %v288 = vadd.f32 %v47, %v240
  %v289 = vadd.f32 %v48, %v245
  %v290 = vadd.f32 %v49, %v248
  %v291 = vadd.f32 %v50, %v253
  %v292 = vadd.f32 %v51, %v256
  %v293 = vadd.f32 %v52, %v261
  %v294 = vadd.f32 %v53, %v264
  %v295 = vadd.f32 %v54, %v269
  %v296 = vadd.f32 %v55, %v272
  %v297 = vadd.f32 %v56, %v277
  %v298 = vadd.f32 %v57, %v280
  %299 = vst [vmem:[#allocation2] sm:$0xff] %v283
  %300 = vst [vmem:[#allocation2 + $0x8] sm:$0xff] %v284
  %301 = vst [vmem:[#allocation2 + $0x10] sm:$0xff] %v285
  %302 = vst [vmem:[#allocation2 + $0x18] sm:$0xff] %v286
  %303 = vst [vmem:[#allocation2 + $0x20] sm:$0xff] %v287
  %304 = vst [vmem:[#allocation2 + $0x28] sm:$0xff] %v288
  %305 = vst [vmem:[#allocation2 + $0x30] sm:$0xff] %v289
  %306 = vst [vmem:[#allocation2 + $0x38] sm:$0xff] %v290
  %307 = vst [vmem:[#allocation2 + $0x40] sm:$0xff] %v291
  %308 = vst [vmem:[#allocation2 + $0x48] sm:$0xff] %v292
  %309 = vst [vmem:[#allocation2 + $0x50] sm:$0xff] %v293
  %310 = vst [vmem:[#allocation2 + $0x58] sm:$0xff] %v294
  %311 = vst [vmem:[#allocation2 + $0x60] sm:$0xff] %v295
  %312 = vst [vmem:[#allocation2 + $0x68] sm:$0xff] %v296
  %313 = vst [vmem:[#allocation2 + $0x70] sm:$0xff] %v297
  %314 = vst [vmem:[#allocation2 + $0x78] sm:$0xff] %v298
  // Predicated region
  $region18: #{_forward.7} parent=0 // pred_check
    %p315 = pneg %p15
  $region19: #{_forward.7} parent=0 // pred_check_branch
    %317 = sbr.rel (%p315) target = $region21
  $region20: #{_forward.7} parent=0 // pred_region
    %v318 = vld [vmem:[#allocation2] sm:$0xff]
    %v319 = vld [vmem:[#allocation2 + $0x8] sm:$0xff]
    %v320 = vld [vmem:[#allocation2 + $0x10] sm:$0xff]
    %v321 = vld [vmem:[#allocation2 + $0x18] sm:$0xff]
    %v322 = vld [vmem:[#allocation2 + $0x20] sm:$0xff]
    %v323 = vld [vmem:[#allocation2 + $0x28] sm:$0xff]
    %v324 = vld [vmem:[#allocation2 + $0x30] sm:$0xff]
    %v325 = vld [vmem:[#allocation2 + $0x38] sm:$0xff]
    %v326 = vld [vmem:[#allocation2 + $0x40] sm:$0xff]
    %v327 = vld [vmem:[#allocation2 + $0x48] sm:$0xff]
    %v328 = vld [vmem:[#allocation2 + $0x50] sm:$0xff]
    %v329 = vld [vmem:[#allocation2 + $0x58] sm:$0xff]
    %v330 = vld [vmem:[#allocation2 + $0x60] sm:$0xff]
    %v331 = vld [vmem:[#allocation2 + $0x68] sm:$0xff]
    %v332 = vld [vmem:[#allocation2 + $0x70] sm:$0xff]
    %v333 = vld [vmem:[#allocation2 + $0x78] sm:$0xff]
    %v334 = vmax.f32 %v318, 0.0
    %v335 = vmax.f32 %v319, 0.0
    %v336 = vmax.f32 %v320, 0.0
    %v337 = vmax.f32 %v321, 0.0
    %v338 = vmax.f32 %v322, 0.0
    %v339 = vmax.f32 %v323, 0.0
    %v340 = vmax.f32 %v324, 0.0
    %v341 = vmax.f32 %v325, 0.0
    %v342 = vmax.f32 %v326, 0.0
    %v343 = vmax.f32 %v327, 0.0
    %v344 = vmax.f32 %v328, 0.0
    %v345 = vmax.f32 %v329, 0.0
    %v346 = vmax.f32 %v330, 0.0
    %v347 = vmax.f32 %v331, 0.0
    %v348 = vmax.f32 %v332, 0.0
    %v349 = vmax.f32 %v333, 0.0
    %350 = vst [vmem:[%s3] sm:$0xff] %v334
    %351 = vst [vmem:[%s3 + $0x8] sm:$0xff] %v335
    %352 = vst [vmem:[%s3 + $0x10] sm:$0xff] %v336
    %353 = vst [vmem:[%s3 + $0x18] sm:$0xff] %v337
    %354 = vst [vmem:[%s3 + $0x20] sm:$0xff] %v338
    %355 = vst [vmem:[%s3 + $0x28] sm:$0xff] %v339
    %356 = vst [vmem:[%s3 + $0x30] sm:$0xff] %v340
    %357 = vst [vmem:[%s3 + $0x38] sm:$0xff] %v341
    %358 = vst [vmem:[%s3 + $0x40] sm:$0xff] %v342
    %359 = vst [vmem:[%s3 + $0x48] sm:$0xff] %v343
    %360 = vst [vmem:[%s3 + $0x50] sm:$0xff] %v344
    %361 = vst [vmem:[%s3 + $0x58] sm:$0xff] %v345
    %362 = vst [vmem:[%s3 + $0x60] sm:$0xff] %v346
    %363 = vst [vmem:[%s3 + $0x68] sm:$0xff] %v347
    %364 = vst [vmem:[%s3 + $0x70] sm:$0xff] %v348
    %365 = vst [vmem:[%s3 + $0x78] sm:$0xff] %v349
  $region21: #{_forward.7} parent=0 // pred_fallthru
    _
  // Predicated region
  $region22: #{_forward.7} parent=0 // pred_check
    _
  $region23: #{_forward.7} parent=0 // pred_check_branch
    %367 = sbr.rel (0) target = $region25
  $region24: #{_forward.7} parent=0 // pred_region
    _
  $region25: #{_forward.7} parent=0 // pred_fallthru
    _
  // Predicated region
  $region26: #{_forward.7} parent=0 // pred_check
    _
  $region27: #{_forward.7} parent=0 // pred_check_branch
    %369 = sbr.rel (0) target = $region29
  $region28: #{_forward.7} parent=0 // pred_region
    _
  $region29: #{_forward.7} parent=0 // pred_fallthru
    _

// kernel: _forward.4
$region0: #{_forward.4}
  #allocation0 [shape = 'u32[]', space=smem, size = 0x4, offset = 0x4, fixed_abs, tag = 'smem constant byte address 0x4 - core index']
  #allocation1 [shape = 'u32[144,128]{1,0:T(1,128)}', space=vmem, size = 0x12000, scoped, tag = 'internal scratch']
  %s0 = inlined_call_operand.vmem [shape: bf16[128,128], index: 0, kind: input, shape index: {}]
  %s1 = inlined_call_operand.vmem [shape: bf16[128,128], index: 1, kind: input, shape index: {}]
  %s2 = inlined_call_operand.vmem [shape: bf16[128,128], index: 2, kind: output, shape index: {}]
  %s3 = sld [smem:[#allocation0]]
  $region18: #{_forward.4} parent=0
    _
  %s5 = ssub.s32 1, %s3
  %s6 = scalar_select 0, %s5, %s3
  // Predicated region
  $region2: #{_forward.4} parent=0 // pred_check
    _
  $region3: #{_forward.4} parent=0 // pred_check_branch
    %8 = sbr.rel (0) target = $region5
  $region4: #{_forward.4} parent=0 // pred_region
    _
  $region5: #{_forward.4} parent=0 // pred_fallthru
    _
  // Predicated region
  $region6: #{_forward.4} parent=0 // pred_check
    _
  $region7: #{_forward.4} parent=0 // pred_check_branch
    %10 = sbr.rel (0) target = $region9
  $region8: #{_forward.4} parent=0 // pred_region
    _
  $region9: #{_forward.4} parent=0 // pred_fallthru
    _
  %v12 = vld [vmem:[%s0] sm:$0xf]
  %v13 = vld [vmem:[%s0 + $0x4] sm:$0xf]
  %v14 = vld [vmem:[%s0 + $0x8] sm:$0xf]
  %v15 = vld [vmem:[%s0 + $0xc] sm:$0xf]
  %v16 = vld [vmem:[%s0 + $0x10] sm:$0xf]
  %v17 = vld [vmem:[%s0 + $0x14] sm:$0xf]
  %v18 = vld [vmem:[%s0 + $0x18] sm:$0xf]
  %v19 = vld [vmem:[%s0 + $0x1c] sm:$0xf]
  %v20 = vld [vmem:[%s0 + $0x20] sm:$0xf]
  %v21 = vld [vmem:[%s0 + $0x24] sm:$0xf]
  %v22 = vld [vmem:[%s0 + $0x28] sm:$0xf]
  %v23 = vld [vmem:[%s0 + $0x2c] sm:$0xf]
  %v24 = vld [vmem:[%s0 + $0x30] sm:$0xf]
  %v25 = vld [vmem:[%s0 + $0x34] sm:$0xf]
  %v26 = vld [vmem:[%s0 + $0x38] sm:$0xf]
  %v27 = vld [vmem:[%s0 + $0x3c] sm:$0xf]
  %v28 = vld [vmem:[%s1] sm:$0xf]
  %v29 = vld [vmem:[%s1 + $0x4] sm:$0xf]
  %v30 = vld [vmem:[%s1 + $0x8] sm:$0xf]
  %v31 = vld [vmem:[%s1 + $0xc] sm:$0xf]
  %v32 = vld [vmem:[%s1 + $0x10] sm:$0xf]
  %v33 = vld [vmem:[%s1 + $0x14] sm:$0xf]
  %v34 = vld [vmem:[%s1 + $0x18] sm:$0xf]
  %v35 = vld [vmem:[%s1 + $0x1c] sm:$0xf]
  %v36 = vld [vmem:[%s1 + $0x20] sm:$0xf]
  %v37 = vld [vmem:[%s1 + $0x24] sm:$0xf]
  %v38 = vld [vmem:[%s1 + $0x28] sm:$0xf]
  %v39 = vld [vmem:[%s1 + $0x2c] sm:$0xf]
  %v40 = vld [vmem:[%s1 + $0x30] sm:$0xf]
  %v41 = vld [vmem:[%s1 + $0x34] sm:$0xf]
  %v42 = vld [vmem:[%s1 + $0x38] sm:$0xf]
  %v43 = vld [vmem:[%s1 + $0x3c] sm:$0xf]
  %v60 = vunpack.c.l.b16 %v12
  %v61 = vunpack.c.l.b16 %v13
  %v62 = vunpack.c.l.b16 %v14
  %v63 = vunpack.c.l.b16 %v15
  %v64 = vunpack.c.l.b16 %v16
  %v65 = vunpack.c.l.b16 %v17
  %v66 = vunpack.c.l.b16 %v18
  %v67 = vunpack.c.l.b16 %v19
  %v68 = vunpack.c.l.b16 %v20
  %v69 = vunpack.c.l.b16 %v21
  %v70 = vunpack.c.l.b16 %v22
  %v71 = vunpack.c.l.b16 %v23
  %v72 = vunpack.c.l.b16 %v24
  %v73 = vunpack.c.l.b16 %v25
  %v74 = vunpack.c.l.b16 %v26
  %v75 = vunpack.c.l.b16 %v27
  %v76 = vpack.c.b16 %v61, %v60
  %v77 = vpack.c.b16 %v63, %v62
  %v78 = vpack.c.b16 %v65, %v64
  %v79 = vpack.c.b16 %v67, %v66
  %v80 = vpack.c.b16 %v69, %v68
  %v81 = vpack.c.b16 %v71, %v70
  %v82 = vpack.c.b16 %v73, %v72
  %v83 = vpack.c.b16 %v75, %v74
  %v108 = vunpack.c.l.b16 %v28
  %v109 = vunpack.c.l.b16 %v29
  %v110 = vunpack.c.l.b16 %v30
  %v111 = vunpack.c.l.b16 %v31
  %v112 = vunpack.c.l.b16 %v32
  %v113 = vunpack.c.l.b16 %v33
  %v114 = vunpack.c.l.b16 %v34
  %v115 = vunpack.c.l.b16 %v35
  %v116 = vunpack.c.l.b16 %v36
  %v117 = vunpack.c.l.b16 %v37
  %v118 = vunpack.c.l.b16 %v38
  %v119 = vunpack.c.l.b16 %v39
  %v120 = vunpack.c.l.b16 %v40
  %v121 = vunpack.c.l.b16 %v41
  %v122 = vunpack.c.l.b16 %v42
  %v123 = vunpack.c.l.b16 %v43
  %v124 = vpack.c.b16 %v109, %v108
  %v125 = vpack.c.b16 %v111, %v110
  %v126 = vpack.c.b16 %v113, %v112
  %v127 = vpack.c.b16 %v115, %v114
  %v128 = vpack.c.b16 %v117, %v116
  %v129 = vpack.c.b16 %v119, %v118
  %v130 = vpack.c.b16 %v121, %v120
  %v131 = vpack.c.b16 %v123, %v122
  %140 = vmatprep.subr.bf16.mxu0 0
  %141 = vmatpush1.bf16.msra.mxu0 %v124
  %142 = vmatprep.subr.bf16.mxu0 0
  %143 = vmatpush1.bf16.msra.mxu0 %v125
  %144 = vmatprep.subr.bf16.mxu0 0
  %145 = vmatpush1.bf16.msra.mxu0 %v126
  %146 = vmatprep.subr.bf16.mxu0 0
  %147 = vmatpush1.bf16.msra.mxu0 %v127
  %148 = vmatprep.subr.bf16.mxu0 0
  %149 = vmatpush1.bf16.msra.mxu0 %v128
  %150 = vmatprep.subr.bf16.mxu0 0
  %151 = vmatpush1.bf16.msra.mxu0 %v129
  %152 = vmatprep.subr.bf16.mxu0 0
  %153 = vmatpush1.bf16.msra.mxu0 %v130
  %154 = vmatprep.subr.bf16.mxu0 0
  %155 = vmatpush1.bf16.msra.mxu0 %v131
  %156 = vmatprep.subr.bf16.mxu0 0
  %157 = vmatpush1.bf16.msra.mxu0 0
  %158 = vmatprep.subr.bf16.mxu0 0
  %159 = vmatpush1.bf16.msra.mxu0 0
  %160 = vmatprep.subr.bf16.mxu0 0
  %161 = vmatpush1.bf16.msra.mxu0 0
  %162 = vmatprep.subr.bf16.mxu0 0
  %163 = vmatpush1.bf16.msra.mxu0 0
  %164 = vmatprep.subr.bf16.mxu0 0
  %165 = vmatpush1.bf16.msra.mxu0 0
  %166 = vmatprep.subr.bf16.mxu0 0
  %167 = vmatpush1.bf16.msra.mxu0 0
  %168 = vmatprep.subr.bf16.mxu0 0
  %169 = vmatpush1.bf16.msra.mxu0 0
  %170 = vmatprep.subr.bf16.mxu0 0
  %171 = vmatpush1.bf16.msra.mxu0 0
  %172 = vmatprep.mubr.bf16.mxu0 0
  %173 = vmatmul.mubr.bf16.gmra.mrb[0].mxu0 %v76
  %v174 = vpop.f32.mrb[0].mxu0
  %v175 = vadd.f32 0.0, %v174
  %v176 = vpop.f32.mrb[0].mxu0
  %v177 = vpop.f32.mrb[0].mxu0
  %v178 = vadd.f32 0.0, %v177
  %v179 = vpop.f32.mrb[0].mxu0
  %180 = vmatprep.mubr.bf16.mxu0 0
  %181 = vmatmul.mubr.bf16.gmra.mrb[0].mxu0 %v77
  %v182 = vpop.f32.mrb[0].mxu0
  %v183 = vadd.f32 0.0, %v182
  %v184 = vpop.f32.mrb[0].mxu0
  %v185 = vpop.f32.mrb[0].mxu0
  %v186 = vadd.f32 0.0, %v185
  %v187 = vpop.f32.mrb[0].mxu0
  %188 = vmatprep.mubr.bf16.mxu0 0
  %189 = vmatmul.mubr.bf16.gmra.mrb[0].mxu0 %v78
  %v190 = vpop.f32.mrb[0].mxu0
  %v191 = vadd.f32 0.0, %v190
  %v192 = vpop.f32.mrb[0].mxu0
  %v193 = vpop.f32.mrb[0].mxu0
  %v194 = vadd.f32 0.0, %v193
  %v195 = vpop.f32.mrb[0].mxu0
  %196 = vmatprep.mubr.bf16.mxu0 0
  %197 = vmatmul.mubr.bf16.gmra.mrb[0].mxu0 %v79
  %v198 = vpop.f32.mrb[0].mxu0
  %v199 = vadd.f32 0.0, %v198
  %v200 = vpop.f32.mrb[0].mxu0
  %v201 = vpop.f32.mrb[0].mxu0
  %v202 = vadd.f32 0.0, %v201
  %v203 = vpop.f32.mrb[0].mxu0
  %204 = vmatprep.mubr.bf16.mxu0 0
  %205 = vmatmul.mubr.bf16.gmra.mrb[0].mxu0 %v80
  %v206 = vpop.f32.mrb[0].mxu0
  %v207 = vadd.f32 0.0, %v206
  %v208 = vpop.f32.mrb[0].mxu0
  %v209 = vpop.f32.mrb[0].mxu0
  %v210 = vadd.f32 0.0, %v209
  %v211 = vpop.f32.mrb[0].mxu0
  %212 = vmatprep.mubr.bf16.mxu0 0
  %213 = vmatmul.mubr.bf16.gmra.mrb[0].mxu0 %v81
  %v214 = vpop.f32.mrb[0].mxu0
  %v215 = vadd.f32 0.0, %v214
  %v216 = vpop.f32.mrb[0].mxu0
  %v217 = vpop.f32.mrb[0].mxu0
  %v218 = vadd.f32 0.0, %v217
  %v219 = vpop.f32.mrb[0].mxu0
  %220 = vmatprep.mubr.bf16.mxu0 0
  %221 = vmatmul.mubr.bf16.gmra.mrb[0].mxu0 %v82
  %v222 = vpop.f32.mrb[0].mxu0
  %v223 = vadd.f32 0.0, %v222
  %v224 = vpop.f32.mrb[0].mxu0
  %v225 = vpop.f32.mrb[0].mxu0
  %v226 = vadd.f32 0.0, %v225
  %v227 = vpop.f32.mrb[0].mxu0
  %228 = vmatprep.mubr.bf16.mxu0 0
  %229 = vmatmul.mubr.bf16.gmra.mrb[0].mxu0 %v83
  %v230 = vpop.f32.mrb[0].mxu0
  %v231 = vadd.f32 0.0, %v230
  %v232 = vpop.f32.mrb[0].mxu0
  %v233 = vpop.f32.mrb[0].mxu0
  %v234 = vadd.f32 0.0, %v233
  %v235 = vpop.f32.mrb[0].mxu0
  %236 = vdwg.mxu0
  %v237 = vpack.c.bf16 %v178, %v175
  %v238 = vpack.c.bf16 %v186, %v183
  %v239 = vpack.c.bf16 %v194, %v191
  %v240 = vpack.c.bf16 %v202, %v199
  %v241 = vpack.c.bf16 %v210, %v207
  %v242 = vpack.c.bf16 %v218, %v215
  %v243 = vpack.c.bf16 %v226, %v223
  %v244 = vpack.c.bf16 %v234, %v231
  %v253 = vunpack.c.l.b16 %v237
  %v254 = vunpack.c.h.b16 %v237
  %v255 = vunpack.c.l.b16 %v238
  %v256 = vunpack.c.h.b16 %v238
  %v257 = vunpack.c.l.b16 %v239
  %v258 = vunpack.c.h.b16 %v239
  %v259 = vunpack.c.l.b16 %v240
  %v260 = vunpack.c.h.b16 %v240
  %v261 = vunpack.c.l.b16 %v241
  %v262 = vunpack.c.h.b16 %v241
  %v263 = vunpack.c.l.b16 %v242
  %v264 = vunpack.c.h.b16 %v242
  %v265 = vunpack.c.l.b16 %v243
  %v266 = vunpack.c.h.b16 %v243
  %v267 = vunpack.c.l.b16 %v244
  %v268 = vunpack.c.h.b16 %v244
  %v269 = vpack.c.b16 %v253, %v253
  %v270 = vpack.c.b16 %v254, %v254
  %v271 = vpack.c.b16 %v255, %v255
  %v272 = vpack.c.b16 %v256, %v256
  %v273 = vpack.c.b16 %v257, %v257
  %v274 = vpack.c.b16 %v258, %v258
  %v275 = vpack.c.b16 %v259, %v259
  %v276 = vpack.c.b16 %v260, %v260
  %v277 = vpack.c.b16 %v261, %v261
  %v278 = vpack.c.b16 %v262, %v262
  %v279 = vpack.c.b16 %v263, %v263
  %v280 = vpack.c.b16 %v264, %v264
  %v281 = vpack.c.b16 %v265, %v265
  %v282 = vpack.c.b16 %v266, %v266
  %v283 = vpack.c.b16 %v267, %v267
  %v284 = vpack.c.b16 %v268, %v268
  %301 = vst [vmem:[%s2] sm:$0xf] %v269
  %302 = vst [vmem:[%s2 + $0x4] sm:$0xf] %v270
  %303 = vst [vmem:[%s2 + $0x8] sm:$0xf] %v271
  %304 = vst [vmem:[%s2 + $0xc] sm:$0xf] %v272
  %305 = vst [vmem:[%s2 + $0x10] sm:$0xf] %v273
  %306 = vst [vmem:[%s2 + $0x14] sm:$0xf] %v274
  %307 = vst [vmem:[%s2 + $0x18] sm:$0xf] %v275
  %308 = vst [vmem:[%s2 + $0x1c] sm:$0xf] %v276
  %309 = vst [vmem:[%s2 + $0x20] sm:$0xf] %v277
  %310 = vst [vmem:[%s2 + $0x24] sm:$0xf] %v278
  %311 = vst [vmem:[%s2 + $0x28] sm:$0xf] %v279
  %312 = vst [vmem:[%s2 + $0x2c] sm:$0xf] %v280
  %313 = vst [vmem:[%s2 + $0x30] sm:$0xf] %v281
  %314 = vst [vmem:[%s2 + $0x34] sm:$0xf] %v282
  %315 = vst [vmem:[%s2 + $0x38] sm:$0xf] %v283
  %316 = vst [vmem:[%s2 + $0x3c] sm:$0xf] %v284
  // Predicated region
  $region10: #{_forward.4} parent=0 // pred_check
    _
  $region11: #{_forward.4} parent=0 // pred_check_branch
    %318 = sbr.rel (0) target = $region13
  $region12: #{_forward.4} parent=0 // pred_region
    _
  $region13: #{_forward.4} parent=0 // pred_fallthru
    _
  // Predicated region
  $region14: #{_forward.4} parent=0 // pred_check
    _
  $region15: #{_forward.4} parent=0 // pred_check_branch
    %320 = sbr.rel (0) target = $region17
  $region16: #{_forward.4} parent=0 // pred_region
    _
  $region17: #{_forward.4} parent=0 // pred_fallthru
    _

// kernel: _forward.5
$region0: #{_forward.5}
  #allocation0 [shape = 'u32[]', space=smem, size = 0x4, offset = 0x4, fixed_abs, tag = 'smem constant byte address 0x4 - core index']
  #allocation1 [shape = 'u32[144,128]{1,0:T(1,128)}', space=vmem, size = 0x12000, scoped, tag = 'internal scratch']
  #allocation2 [shape = 'f32[128,128]{1,0:T(8,128)}', space=vmem, size = 0x10000, scoped, tag = 'scratch operand']
  %s0 = inlined_call_operand.vmem [shape: bf16[128,128], index: 0, kind: input, shape index: {}]
  %s1 = inlined_call_operand.vmem [shape: bf16[128,128], index: 1, kind: input, shape index: {}]
  %s2 = inlined_call_operand.vmem [shape: f32[1,128], index: 2, kind: input, shape index: {}]
  %s3 = inlined_call_operand.vmem [shape: bf16[128,128], index: 3, kind: output, shape index: {}]
  %s4 = sld [smem:[#allocation0]]
  $region30: #{_forward.5} parent=0
    _
  %s6 = ssub.s32 1, %s4
  %s7 = scalar_select 0, %s6, %s4
  // Predicated region
  $region2: #{_forward.5} parent=0 // pred_check
    _
  $region3: #{_forward.5} parent=0 // pred_check_branch
    %9 = sbr.rel (0) target = $region5
  $region4: #{_forward.5} parent=0 // pred_region
    _
  $region5: #{_forward.5} parent=0 // pred_fallthru
    _
  // Predicated region
  $region6: #{_forward.5} parent=0 // pred_check
    _
  $region7: #{_forward.5} parent=0 // pred_check_branch
    %11 = sbr.rel (0) target = $region9
  $region8: #{_forward.5} parent=0 // pred_region
    _
  $region9: #{_forward.5} parent=0 // pred_fallthru
    _
  // Predicated region
  $region10: #{_forward.5} parent=0 // pred_check
    _
  $region11: #{_forward.5} parent=0 // pred_check_branch
    %13 = sbr.rel (0) target = $region13
  $region12: #{_forward.5} parent=0 // pred_region
    _
  $region13: #{_forward.5} parent=0 // pred_fallthru
    _
  %p15 = scmp.eq.s32.totalorder 0, 0
  // Predicated region
  $region14: #{_forward.5} parent=0 // pred_check
    %p16 = pneg %p15
  $region15: #{_forward.5} parent=0 // pred_check_branch
    %18 = sbr.rel (%p16) target = $region17
  $region16: #{_forward.5} parent=0 // pred_region
    %v19 = vld [vmem:[%s2] sm:$0x1]
    %v21 = vlaneseq
    %v22 = vshrl.u32 %v21, 7
    %v23 = vsub.s32 0, %v22
    %v24 = vrot.slane %v19, %v23
    %26 = vst [vmem:[#allocation2] sm:$0xff] %v24
    %27 = vst [vmem:[#allocation2 + $0x8] sm:$0xff] %v24
    %28 = vst [vmem:[#allocation2 + $0x10] sm:$0xff] %v24
    %29 = vst [vmem:[#allocation2 + $0x18] sm:$0xff] %v24
    %30 = vst [vmem:[#allocation2 + $0x20] sm:$0xff] %v24
    %31 = vst [vmem:[#allocation2 + $0x28] sm:$0xff] %v24
    %32 = vst [vmem:[#allocation2 + $0x30] sm:$0xff] %v24
    %33 = vst [vmem:[#allocation2 + $0x38] sm:$0xff] %v24
    %34 = vst [vmem:[#allocation2 + $0x40] sm:$0xff] %v24
    %35 = vst [vmem:[#allocation2 + $0x48] sm:$0xff] %v24
    %36 = vst [vmem:[#allocation2 + $0x50] sm:$0xff] %v24
    %37 = vst [vmem:[#allocation2 + $0x58] sm:$0xff] %v24
    %38 = vst [vmem:[#allocation2 + $0x60] sm:$0xff] %v24
    %39 = vst [vmem:[#allocation2 + $0x68] sm:$0xff] %v24
    %40 = vst [vmem:[#allocation2 + $0x70] sm:$0xff] %v24
    %41 = vst [vmem:[#allocation2 + $0x78] sm:$0xff] %v24
  $region17: #{_forward.5} parent=0 // pred_fallthru
    _
  %v42 = vld [vmem:[#allocation2] sm:$0xff]
  %v43 = vld [vmem:[#allocation2 + $0x8] sm:$0xff]
  %v44 = vld [vmem:[#allocation2 + $0x10] sm:$0xff]
  %v45 = vld [vmem:[#allocation2 + $0x18] sm:$0xff]
  %v46 = vld [vmem:[#allocation2 + $0x20] sm:$0xff]
  %v47 = vld [vmem:[#allocation2 + $0x28] sm:$0xff]
  %v48 = vld [vmem:[#allocation2 + $0x30] sm:$0xff]
  %v49 = vld [vmem:[#allocation2 + $0x38] sm:$0xff]
  %v50 = vld [vmem:[#allocation2 + $0x40] sm:$0xff]
  %v51 = vld [vmem:[#allocation2 + $0x48] sm:$0xff]
  %v52 = vld [vmem:[#allocation2 + $0x50] sm:$0xff]
  %v53 = vld [vmem:[#allocation2 + $0x58] sm:$0xff]
  %v54 = vld [vmem:[#allocation2 + $0x60] sm:$0xff]
  %v55 = vld [vmem:[#allocation2 + $0x68] sm:$0xff]
  %v56 = vld [vmem:[#allocation2 + $0x70] sm:$0xff]
  %v57 = vld [vmem:[#allocation2 + $0x78] sm:$0xff]
  %v58 = vld [vmem:[%s0] sm:$0xf]
  %v59 = vld [vmem:[%s0 + $0x4] sm:$0xf]
  %v60 = vld [vmem:[%s0 + $0x8] sm:$0xf]
  %v61 = vld [vmem:[%s0 + $0xc] sm:$0xf]
  %v62 = vld [vmem:[%s0 + $0x10] sm:$0xf]
  %v63 = vld [vmem:[%s0 + $0x14] sm:$0xf]
  %v64 = vld [vmem:[%s0 + $0x18] sm:$0xf]
  %v65 = vld [vmem:[%s0 + $0x1c] sm:$0xf]
  %v66 = vld [vmem:[%s0 + $0x20] sm:$0xf]
  %v67 = vld [vmem:[%s0 + $0x24] sm:$0xf]
  %v68 = vld [vmem:[%s0 + $0x28] sm:$0xf]
  %v69 = vld [vmem:[%s0 + $0x2c] sm:$0xf]
  %v70 = vld [vmem:[%s0 + $0x30] sm:$0xf]
  %v71 = vld [vmem:[%s0 + $0x34] sm:$0xf]
  %v72 = vld [vmem:[%s0 + $0x38] sm:$0xf]
  %v73 = vld [vmem:[%s0 + $0x3c] sm:$0xf]
  %v74 = vld [vmem:[%s1] sm:$0xf]
  %v75 = vld [vmem:[%s1 + $0x4] sm:$0xf]
  %v76 = vld [vmem:[%s1 + $0x8] sm:$0xf]
  %v77 = vld [vmem:[%s1 + $0xc] sm:$0xf]
  %v78 = vld [vmem:[%s1 + $0x10] sm:$0xf]
  %v79 = vld [vmem:[%s1 + $0x14] sm:$0xf]
  %v80 = vld [vmem:[%s1 + $0x18] sm:$0xf]
  %v81 = vld [vmem:[%s1 + $0x1c] sm:$0xf]
  %v82 = vld [vmem:[%s1 + $0x20] sm:$0xf]
  %v83 = vld [vmem:[%s1 + $0x24] sm:$0xf]
  %v84 = vld [vmem:[%s1 + $0x28] sm:$0xf]
  %v85 = vld [vmem:[%s1 + $0x2c] sm:$0xf]
  %v86 = vld [vmem:[%s1 + $0x30] sm:$0xf]
  %v87 = vld [vmem:[%s1 + $0x34] sm:$0xf]
  %v88 = vld [vmem:[%s1 + $0x38] sm:$0xf]
  %v89 = vld [vmem:[%s1 + $0x3c] sm:$0xf]
  %v106 = vunpack.c.l.b16 %v58
  %v107 = vunpack.c.l.b16 %v59
  %v108 = vunpack.c.l.b16 %v60
  %v109 = vunpack.c.l.b16 %v61
  %v110 = vunpack.c.l.b16 %v62
  %v111 = vunpack.c.l.b16 %v63
  %v112 = vunpack.c.l.b16 %v64
  %v113 = vunpack.c.l.b16 %v65
  %v114 = vunpack.c.l.b16 %v66
  %v115 = vunpack.c.l.b16 %v67
  %v116 = vunpack.c.l.b16 %v68
  %v117 = vunpack.c.l.b16 %v69
  %v118 = vunpack.c.l.b16 %v70
  %v119 = vunpack.c.l.b16 %v71
  %v120 = vunpack.c.l.b16 %v72
  %v121 = vunpack.c.l.b16 %v73
  %v122 = vpack.c.b16 %v107, %v106
  %v123 = vpack.c.b16 %v109, %v108
  %v124 = vpack.c.b16 %v111, %v110
  %v125 = vpack.c.b16 %v113, %v112
  %v126 = vpack.c.b16 %v115, %v114
  %v127 = vpack.c.b16 %v117, %v116
  %v128 = vpack.c.b16 %v119, %v118
  %v129 = vpack.c.b16 %v121, %v120
  %v154 = vunpack.c.l.b16 %v74
  %v155 = vunpack.c.l.b16 %v75
  %v156 = vunpack.c.l.b16 %v76
  %v157 = vunpack.c.l.b16 %v77
  %v158 = vunpack.c.l.b16 %v78
  %v159 = vunpack.c.l.b16 %v79
  %v160 = vunpack.c.l.b16 %v80
  %v161 = vunpack.c.l.b16 %v81
  %v162 = vunpack.c.l.b16 %v82
  %v163 = vunpack.c.l.b16 %v83
  %v164 = vunpack.c.l.b16 %v84
  %v165 = vunpack.c.l.b16 %v85
  %v166 = vunpack.c.l.b16 %v86
  %v167 = vunpack.c.l.b16 %v87
  %v168 = vunpack.c.l.b16 %v88
  %v169 = vunpack.c.l.b16 %v89
  %v170 = vpack.c.b16 %v155, %v154
  %v171 = vpack.c.b16 %v157, %v156
  %v172 = vpack.c.b16 %v159, %v158
  %v173 = vpack.c.b16 %v161, %v160
  %v174 = vpack.c.b16 %v163, %v162
  %v175 = vpack.c.b16 %v165, %v164
  %v176 = vpack.c.b16 %v167, %v166
  %v177 = vpack.c.b16 %v169, %v168
  %186 = vmatprep.subr.bf16.mxu0 0
  %187 = vmatpush1.bf16.msra.mxu0 %v170
  %188 = vmatprep.subr.bf16.mxu0 0
  %189 = vmatpush1.bf16.msra.mxu0 %v171
  %190 = vmatprep.subr.bf16.mxu0 0
  %191 = vmatpush1.bf16.msra.mxu0 %v172
  %192 = vmatprep.subr.bf16.mxu0 0
  %193 = vmatpush1.bf16.msra.mxu0 %v173
  %194 = vmatprep.subr.bf16.mxu0 0
  %195 = vmatpush1.bf16.msra.mxu0 %v174
  %196 = vmatprep.subr.bf16.mxu0 0
  %197 = vmatpush1.bf16.msra.mxu0 %v175
  %198 = vmatprep.subr.bf16.mxu0 0
  %199 = vmatpush1.bf16.msra.mxu0 %v176
  %200 = vmatprep.subr.bf16.mxu0 0
  %201 = vmatpush1.bf16.msra.mxu0 %v177
  %202 = vmatprep.subr.bf16.mxu0 0
  %203 = vmatpush1.bf16.msra.mxu0 0
  %204 = vmatprep.subr.bf16.mxu0 0
  %205 = vmatpush1.bf16.msra.mxu0 0
  %206 = vmatprep.subr.bf16.mxu0 0
  %207 = vmatpush1.bf16.msra.mxu0 0
  %208 = vmatprep.subr.bf16.mxu0 0
  %209 = vmatpush1.bf16.msra.mxu0 0
  %210 = vmatprep.subr.bf16.mxu0 0
  %211 = vmatpush1.bf16.msra.mxu0 0
  %212 = vmatprep.subr.bf16.mxu0 0
  %213 = vmatpush1.bf16.msra.mxu0 0
  %214 = vmatprep.subr.bf16.mxu0 0
  %215 = vmatpush1.bf16.msra.mxu0 0
  %216 = vmatprep.subr.bf16.mxu0 0
  %217 = vmatpush1.bf16.msra.mxu0 0
  %218 = vmatprep.mubr.bf16.mxu0 0
  %219 = vmatmul.mubr.bf16.gmra.mrb[0].mxu0 %v122
  %v220 = vpop.f32.mrb[0].mxu0
  %v221 = vadd.f32 0.0, %v220
  %v222 = vpop.f32.mrb[0].mxu0
  %v223 = vpop.f32.mrb[0].mxu0
  %v224 = vadd.f32 0.0, %v223
  %v225 = vpop.f32.mrb[0].mxu0
  %226 = vmatprep.mubr.bf16.mxu0 0
  %227 = vmatmul.mubr.bf16.gmra.mrb[0].mxu0 %v123
  %v228 = vpop.f32.mrb[0].mxu0
  %v229 = vadd.f32 0.0, %v228
  %v230 = vpop.f32.mrb[0].mxu0
  %v231 = vpop.f32.mrb[0].mxu0
  %v232 = vadd.f32 0.0, %v231
  %v233 = vpop.f32.mrb[0].mxu0
  %234 = vmatprep.mubr.bf16.mxu0 0
  %235 = vmatmul.mubr.bf16.gmra.mrb[0].mxu0 %v124
  %v236 = vpop.f32.mrb[0].mxu0
  %v237 = vadd.f32 0.0, %v236
  %v238 = vpop.f32.mrb[0].mxu0
  %v239 = vpop.f32.mrb[0].mxu0
  %v240 = vadd.f32 0.0, %v239
  %v241 = vpop.f32.mrb[0].mxu0
  %242 = vmatprep.mubr.bf16.mxu0 0
  %243 = vmatmul.mubr.bf16.gmra.mrb[0].mxu0 %v125
  %v244 = vpop.f32.mrb[0].mxu0
  %v245 = vadd.f32 0.0, %v244
  %v246 = vpop.f32.mrb[0].mxu0
  %v247 = vpop.f32.mrb[0].mxu0
  %v248 = vadd.f32 0.0, %v247
  %v249 = vpop.f32.mrb[0].mxu0
  %250 = vmatprep.mubr.bf16.mxu0 0
  %251 = vmatmul.mubr.bf16.gmra.mrb[0].mxu0 %v126
  %v252 = vpop.f32.mrb[0].mxu0
  %v253 = vadd.f32 0.0, %v252
  %v254 = vpop.f32.mrb[0].mxu0
  %v255 = vpop.f32.mrb[0].mxu0
  %v256 = vadd.f32 0.0, %v255
  %v257 = vpop.f32.mrb[0].mxu0
  %258 = vmatprep.mubr.bf16.mxu0 0
  %259 = vmatmul.mubr.bf16.gmra.mrb[0].mxu0 %v127
  %v260 = vpop.f32.mrb[0].mxu0
  %v261 = vadd.f32 0.0, %v260
  %v262 = vpop.f32.mrb[0].mxu0
  %v263 = vpop.f32.mrb[0].mxu0
  %v264 = vadd.f32 0.0, %v263
  %v265 = vpop.f32.mrb[0].mxu0
  %266 = vmatprep.mubr.bf16.mxu0 0
  %267 = vmatmul.mubr.bf16.gmra.mrb[0].mxu0 %v128
  %v268 = vpop.f32.mrb[0].mxu0
  %v269 = vadd.f32 0.0, %v268
  %v270 = vpop.f32.mrb[0].mxu0
  %v271 = vpop.f32.mrb[0].mxu0
  %v272 = vadd.f32 0.0, %v271
  %v273 = vpop.f32.mrb[0].mxu0
  %274 = vmatprep.mubr.bf16.mxu0 0
  %275 = vmatmul.mubr.bf16.gmra.mrb[0].mxu0 %v129
  %v276 = vpop.f32.mrb[0].mxu0
  %v277 = vadd.f32 0.0, %v276
  %v278 = vpop.f32.mrb[0].mxu0
  %v279 = vpop.f32.mrb[0].mxu0
  %v280 = vadd.f32 0.0, %v279
  %v281 = vpop.f32.mrb[0].mxu0
  %282 = vdwg.mxu0
  %v283 = vadd.f32 %v42, %v221
  %v284 = vadd.f32 %v43, %v224
  %v285 = vadd.f32 %v44, %v229
  %v286 = vadd.f32 %v45, %v232
  %v287 = vadd.f32 %v46, %v237
  %v288 = vadd.f32 %v47, %v240
  %v289 = vadd.f32 %v48, %v245
  %v290 = vadd.f32 %v49, %v248
  %v291 = vadd.f32 %v50, %v253
  %v292 = vadd.f32 %v51, %v256
  %v293 = vadd.f32 %v52, %v261
  %v294 = vadd.f32 %v53, %v264
  %v295 = vadd.f32 %v54, %v269
  %v296 = vadd.f32 %v55, %v272
  %v297 = vadd.f32 %v56, %v277
  %v298 = vadd.f32 %v57, %v280
  %299 = vst [vmem:[#allocation2] sm:$0xff] %v283
  %300 = vst [vmem:[#allocation2 + $0x8] sm:$0xff] %v284
  %301 = vst [vmem:[#allocation2 + $0x10] sm:$0xff] %v285
  %302 = vst [vmem:[#allocation2 + $0x18] sm:$0xff] %v286
  %303 = vst [vmem:[#allocation2 + $0x20] sm:$0xff] %v287
  %304 = vst [vmem:[#allocation2 + $0x28] sm:$0xff] %v288
  %305 = vst [vmem:[#allocation2 + $0x30] sm:$0xff] %v289
  %306 = vst [vmem:[#allocation2 + $0x38] sm:$0xff] %v290
  %307 = vst [vmem:[#allocation2 + $0x40] sm:$0xff] %v291
  %308 = vst [vmem:[#allocation2 + $0x48] sm:$0xff] %v292
  %309 = vst [vmem:[#allocation2 + $0x50] sm:$0xff] %v293
  %310 = vst [vmem:[#allocation2 + $0x58] sm:$0xff] %v294
  %311 = vst [vmem:[#allocation2 + $0x60] sm:$0xff] %v295
  %312 = vst [vmem:[#allocation2 + $0x68] sm:$0xff] %v296
  %313 = vst [vmem:[#allocation2 + $0x70] sm:$0xff] %v297
  %314 = vst [vmem:[#allocation2 + $0x78] sm:$0xff] %v298
  // Predicated region
  $region18: #{_forward.5} parent=0 // pred_check
    %p315 = pneg %p15
  $region19: #{_forward.5} parent=0 // pred_check_branch
    %317 = sbr.rel (%p315) target = $region21
  $region20: #{_forward.5} parent=0 // pred_region
    %v318 = vld [vmem:[#allocation2] sm:$0xff]
    %v319 = vld [vmem:[#allocation2 + $0x8] sm:$0xff]
    %v320 = vld [vmem:[#allocation2 + $0x10] sm:$0xff]
    %v321 = vld [vmem:[#allocation2 + $0x18] sm:$0xff]
    %v322 = vld [vmem:[#allocation2 + $0x20] sm:$0xff]
    %v323 = vld [vmem:[#allocation2 + $0x28] sm:$0xff]
    %v324 = vld [vmem:[#allocation2 + $0x30] sm:$0xff]
    %v325 = vld [vmem:[#allocation2 + $0x38] sm:$0xff]
    %v326 = vld [vmem:[#allocation2 + $0x40] sm:$0xff]
    %v327 = vld [vmem:[#allocation2 + $0x48] sm:$0xff]
    %v328 = vld [vmem:[#allocation2 + $0x50] sm:$0xff]
    %v329 = vld [vmem:[#allocation2 + $0x58] sm:$0xff]
    %v330 = vld [vmem:[#allocation2 + $0x60] sm:$0xff]
    %v331 = vld [vmem:[#allocation2 + $0x68] sm:$0xff]
    %v332 = vld [vmem:[#allocation2 + $0x70] sm:$0xff]
    %v333 = vld [vmem:[#allocation2 + $0x78] sm:$0xff]
    %v334 = vmax.f32 %v318, 0.0
    %v335 = vmax.f32 %v319, 0.0
    %v336 = vmax.f32 %v320, 0.0
    %v337 = vmax.f32 %v321, 0.0
    %v338 = vmax.f32 %v322, 0.0
    %v339 = vmax.f32 %v323, 0.0
    %v340 = vmax.f32 %v324, 0.0
    %v341 = vmax.f32 %v325, 0.0
    %v342 = vmax.f32 %v326, 0.0
    %v343 = vmax.f32 %v327, 0.0
    %v344 = vmax.f32 %v328, 0.0
    %v345 = vmax.f32 %v329, 0.0
    %v346 = vmax.f32 %v330, 0.0
    %v347 = vmax.f32 %v331, 0.0
    %v348 = vmax.f32 %v332, 0.0
    %v349 = vmax.f32 %v333, 0.0
    %v350 = vpack.c.bf16 %v335, %v334
    %v351 = vpack.c.bf16 %v337, %v336
    %v352 = vpack.c.bf16 %v339, %v338
    %v353 = vpack.c.bf16 %v341, %v340
    %v354 = vpack.c.bf16 %v343, %v342
    %v355 = vpack.c.bf16 %v345, %v344
    %v356 = vpack.c.bf16 %v347, %v346
    %v357 = vpack.c.bf16 %v349, %v348
    %v366 = vunpack.c.l.b16 %v350
    %v367 = vunpack.c.h.b16 %v350
    %v368 = vunpack.c.l.b16 %v351
    %v369 = vunpack.c.h.b16 %v351
    %v370 = vunpack.c.l.b16 %v352
    %v371 = vunpack.c.h.b16 %v352
    %v372 = vunpack.c.l.b16 %v353
    %v373 = vunpack.c.h.b16 %v353
    %v374 = vunpack.c.l.b16 %v354
    %v375 = vunpack.c.h.b16 %v354
    %v376 = vunpack.c.l.b16 %v355
    %v377 = vunpack.c.h.b16 %v355
    %v378 = vunpack.c.l.b16 %v356
    %v379 = vunpack.c.h.b16 %v356
    %v380 = vunpack.c.l.b16 %v357
    %v381 = vunpack.c.h.b16 %v357
    %v382 = vpack.c.b16 %v366, %v366
    %v383 = vpack.c.b16 %v367, %v367
    %v384 = vpack.c.b16 %v368, %v368
    %v385 = vpack.c.b16 %v369, %v369
    %v386 = vpack.c.b16 %v370, %v370
    %v387 = vpack.c.b16 %v371, %v371
    %v388 = vpack.c.b16 %v372, %v372
    %v389 = vpack.c.b16 %v373, %v373
    %v390 = vpack.c.b16 %v374, %v374
    %v391 = vpack.c.b16 %v375, %v375
    %v392 = vpack.c.b16 %v376, %v376
    %v393 = vpack.c.b16 %v377, %v377
    %v394 = vpack.c.b16 %v378, %v378
    %v395 = vpack.c.b16 %v379, %v379
    %v396 = vpack.c.b16 %v380, %v380
    %v397 = vpack.c.b16 %v381, %v381
    %414 = vst [vmem:[%s3] sm:$0xf] %v382
    %415 = vst [vmem:[%s3 + $0x4] sm:$0xf] %v383
    %416 = vst [vmem:[%s3 + $0x8] sm:$0xf] %v384
    %417 = vst [vmem:[%s3 + $0xc] sm:$0xf] %v385
    %418 = vst [vmem:[%s3 + $0x10] sm:$0xf] %v386
    %419 = vst [vmem:[%s3 + $0x14] sm:$0xf] %v387
    %420 = vst [vmem:[%s3 + $0x18] sm:$0xf] %v388
    %421 = vst [vmem:[%s3 + $0x1c] sm:$0xf] %v389
    %422 = vst [vmem:[%s3 + $0x20] sm:$0xf] %v390
    %423 = vst [vmem:[%s3 + $0x24] sm:$0xf] %v391
    %424 = vst [vmem:[%s3 + $0x28] sm:$0xf] %v392
    %425 = vst [vmem:[%s3 + $0x2c] sm:$0xf] %v393
    %426 = vst [vmem:[%s3 + $0x30] sm:$0xf] %v394
    %427 = vst [vmem:[%s3 + $0x34] sm:$0xf] %v395
    %428 = vst [vmem:[%s3 + $0x38] sm:$0xf] %v396
    %429 = vst [vmem:[%s3 + $0x3c] sm:$0xf] %v397
  $region21: #{_forward.5} parent=0 // pred_fallthru
    _
  // Predicated region
  $region22: #{_forward.5} parent=0 // pred_check
    _
  $region23: #{_forward.5} parent=0 // pred_check_branch
    %431 = sbr.rel (0) target = $region25
  $region24: #{_forward.5} parent=0 // pred_region
    _
  $region25: #{_forward.5} parent=0 // pred_fallthru
    _
  // Predicated region
  $region26: #{_forward.5} parent=0 // pred_check
    _
  $region27: #{_forward.5} parent=0 // pred_check_branch
    %433 = sbr.rel (0) target = $region29
  $region28: #{_forward.5} parent=0 // pred_region
    _
  $region29: #{_forward.5} parent=0 // pred_fallthru
    _

</llo_original>
